<compile_context>
chip_gen: v6e
topology: v6e:2x2x1
jax: 0.10.0
libtpu: 0.0.40
codegen_flags: <defaults>
</compile_context>

<pallas_src>
from typing import NamedTuple, Optional

import jax
import jax.numpy as jnp
from jax.experimental import pallas as pl
from jax.experimental.pallas import tpu as pltpu


class UpsampleFeatures(NamedTuple):
    low_res: jax.Array
    high_res: jax.Array
    summary: Optional[jax.Array] = None


def _pick_rows_per_step(total_rows: int, wp: int) -> int:
    """Patch-grid rows handled per grid step (token tile tm = R * Wp)."""
    r = 1
    # grow to a ~128-token tile (feeds the MXU full tiles) ...
    while r * 2 * wp <= 128 and r * 2 <= total_rows:
        r *= 2
    # ... then keep growing only while >= 4 grid steps remain (>= 2 per v7x TC)
    while (r * 2 * wp <= 512 and total_rows % (r * 2) == 0
           and total_rows // (r * 2) >= 4):
        r *= 2
    # sublane alignment of the token tile
    while (r * wp) % 8 != 0:
        r += 1
    return r


# ----------------------------------------------------------------------------
# Fused kernel:
#   patches (tm, K) @ w_pe (K, D) + b_pe            (featurizer projection)
#   -> LayerNorm over D (f32 stats) * gamma + (beta + bb_bias)
#   -> @ wc (D, D) + bc                              (cond_bias Linear, token-wise)
#   -> bf16 low-res tile  +  bf16 high-res tile (nearest-neighbor x u, in-kernel)
# ----------------------------------------------------------------------------
def fused_lr_hr(patches, w_pe, wc, consts, *, Wp, upsample):
    """patches (M, K) bf16 -> (lr (M_pad, D) bf16, hr (u*M_pad, u*D) bf16)."""
    M, K = patches.shape
    Kw, D = w_pe.shape
    assert Kw == K and wc.shape == (D, D) and consts.shape == (8, D)
    assert D % 128 == 0, "embed_dim must be a multiple of 128 (lane axis)"
    assert M % Wp == 0
    u = upsample

    rows = M // Wp
    R = _pick_rows_per_step(rows, Wp)
    tm = R * Wp
    n_steps = -(-rows // R)
    M_pad = n_steps * tm
    if M_pad != M:
        patches = jnp.pad(patches, ((0, M_pad - M), (0, 0)))

    def kernel(p_ref, wpe_ref, wc_ref, c_ref, lr_ref, hr_ref):
        # featurizer projection: bf16 MXU inputs, f32 accumulation.
        x = jnp.dot(p_ref[...], wpe_ref[...], preferred_element_type=jnp.float32)
        x = x + c_ref[0:1, :]                          # b_pe

        # normalizer: LayerNorm over D, one-pass variance, f32 stats.
        mu = jnp.mean(x, axis=-1, keepdims=True)
        var = jnp.mean(x * x, axis=-1, keepdims=True) - mu * mu
        xn = (x - mu) * jax.lax.rsqrt(var + 1e-5)

        # affine + bias_buffer (beta + bb_bias pre-folded into one row).
        y = xn * c_ref[1:2, :] + c_ref[2:3, :]

        # cond_bias Linear (token-wise). bf16 LHS on the MXU; expected error is
        # within the bf16 tolerance documented below.
        z = jnp.dot(y.astype(jnp.bfloat16), wc_ref[...],
                    preferred_element_type=jnp.float32) + c_ref[3:4, :]
        zb = z.astype(lr_ref.dtype)

        lr_ref[...] = zb

        # nearest-neighbor x u: replicate each patch-row block (sublane axis)
        # and each column group (lane axis) with aligned (Wp, D) sub-tile stores.
        for rr in range(R):
            row = zb[rr * Wp:(rr + 1) * Wp, :]          # (Wp, D)
            for dr in range(u):
                r0 = (u * rr + dr) * Wp
                for dw in range(u):
                    hr_ref[r0:r0 + Wp, dw * D:(dw + 1) * D] = row

    # VMEM plan: pipelined (double-buffered) blocks + grid-invariant weights
    # (still double-buffered without pl.Buffered(1)) + f32 LN-chain staging.
    bytes_pipelined = 2 * (tm * K * 2 + tm * D * 2 + (u * tm) * (u * D) * 2)
    bytes_weights = 2 * (K * D * 2 + D * D * 2 + 8 * D * 4)
    bytes_scratch = 4 * tm * D * 4
    vmem_est = bytes_pipelined + bytes_weights + bytes_scratch

    cp_kwargs = dict(dimension_semantics=("parallel",))
    if vmem_est > 12 * 1024 * 1024:
        # raise the scoped limit only when needed; keep headroom under v7x's
        # 64 MiB physical VMEM (cap at 48 MiB).
        cp_kwargs["vmem_limit_bytes"] = min(int(1.5 * vmem_est), 48 * 1024 * 1024)

    lr, hr = pl.pallas_call(
        kernel,
        out_shape=(
            jax.ShapeDtypeStruct((M_pad, D), jnp.bfloat16),
            jax.ShapeDtypeStruct((u * M_pad, u * D), jnp.bfloat16),
        ),
        grid=(n_steps,),
        in_specs=[
            pl.BlockSpec((tm, K), lambda i: (i, 0)),    # patches (bf16)
            pl.BlockSpec((K, D), lambda i: (0, 0)),     # w_pe (bf16, invariant)
            pl.BlockSpec((D, D), lambda i: (0, 0)),     # wc   (bf16, invariant)
            pl.BlockSpec((8, D), lambda i: (0, 0)),     # packed consts (f32)
        ],
        out_specs=(
            pl.BlockSpec((tm, D), lambda i: (i, 0)),            # low-res tile
            pl.BlockSpec((u * tm, u * D), lambda i: (i, 0)),    # high-res tile
        ),
        compiler_params=pltpu.CompilerParams(**cp_kwargs),
    )(patches, w_pe, wc, consts)
    return lr, hr


# ----------------------------------------------------------------------------
# Parameters & forward
# ----------------------------------------------------------------------------
def init_params(key, cin, patch_size, embed_dim):
    k1, k2, k3, k4, k5, k6, k7 = jax.random.split(key, 7)
    K = cin * patch_size * patch_size
    D = embed_dim
    return dict(
        w_pe=jax.random.normal(k1, (K, D), jnp.float32) * (1.0 / jnp.sqrt(K)),
        b_pe=jax.random.normal(k2, (1, D), jnp.float32) * 0.02,
        gamma=1.0 + 0.1 * jax.random.normal(k3, (1, D), jnp.float32),
        beta=0.1 * jax.random.normal(k4, (1, D), jnp.float32),
        bb_bias=0.1 * jax.random.normal(k5, (1, D), jnp.float32),
        wc=jax.random.normal(k6, (D, D), jnp.float32) * (1.0 / jnp.sqrt(D)),
        bc=0.02 * jax.random.normal(k7, (1, D), jnp.float32),
    )


def upsampler_forward(x, params, *, patch_size=4, upsample_factor=2):
    """Equivalent of Upsampler.forward (denormalize=False, return_summary=False).

    Outputs are channels-last (NHWC) feature maps in bf16:
      low_res  (B, Hp, Wp, D)
      high_res (B, u*Hp, u*Wp, D)
    """
    B, Cin, H, W = x.shape
    ps = patch_size
    Hp, Wp = H // ps, W // ps
    K = Cin * ps * ps
    D = params["w_pe"].shape[1]
    u = upsample_factor
    M = B * Hp * Wp

    # --- featurizer: patchify (pure data movement, XLA glue; done in bf16) ---
    # TODO(synk): fold patch extraction into the in_spec index_map to skip this
    # HBM round trip of the input; kept as XLA glue for clarity.
    xb = x.astype(jnp.bfloat16)
    patches = xb.reshape(B, Cin, Hp, ps, Wp, ps)
    patches = patches.transpose(0, 2, 4, 1, 3, 5).reshape(M, K)

    # pack the per-channel constants into a single (8, D) block; fold
    # beta + bias_buffer into one row (semantically identical).
    consts = jnp.concatenate(
        [params["b_pe"], params["gamma"], params["beta"] + params["bb_bias"],
         params["bc"], jnp.zeros((4, D), jnp.float32)],
        axis=0,
    )

    lr_flat, hr_flat = fused_lr_hr(
        patches,
        params["w_pe"].astype(jnp.bfloat16),
        params["wc"].astype(jnp.bfloat16),
        consts,
        Wp=Wp,
        upsample=u,
    )

    # Layout-identity reshapes (the kernel already wrote lr/hr in this order).
    lr = lr_flat[:M].reshape(B, Hp, Wp, D)
    hr = hr_flat[:u * M].reshape(B, u * Hp, u * Wp, D)
    return UpsampleFeatures(low_res=lr, high_res=hr)


# ----------------------------------------------------------------------------
# Pure-JAX f32 reference (for correctness check of the fused kernel path)
# ----------------------------------------------------------------------------
def _reference_forward(x, params, *, patch_size, upsample_factor):
    B, Cin, H, W = x.shape
    ps = patch_size
    Hp, Wp = H // ps, W // ps
    K = Cin * ps * ps
    D = params["w_pe"].shape[1]
    u = upsample_factor
    p = x.reshape(B, Cin, Hp, ps, Wp, ps)
    p = p.transpose(0, 2, 4, 1, 3, 5).reshape(B * Hp * Wp, K)
    f = p @ params["w_pe"] + params["b_pe"]
    mu = f.mean(-1, keepdims=True)
    var = ((f - mu) ** 2).mean(-1, keepdims=True)
    f = (f - mu) * jax.lax.rsqrt(var + 1e-5)
    f = f * params["gamma"] + params["beta"] + params["bb_bias"]
    f = f @ params["wc"] + params["bc"]
    lr = f.reshape(B, Hp, Wp, D)
    hr = jnp.repeat(jnp.repeat(lr, u, axis=1), u, axis=2)
    return lr, hr


if __name__ == "__main__":
    key = jax.random.PRNGKey(0)
    kx, kp = jax.random.split(key)

    B, Cin, H, W = 2, 3, 64, 64
    patch_size = 4
    embed_dim = 128          # lane-aligned embedding dim
    upsample_factor = 2

    x = jax.random.normal(kx, (B, Cin, H, W), jnp.float32)
    params = init_params(kp, Cin, patch_size, embed_dim)

    out = upsampler_forward(
        x, params, patch_size=patch_size, upsample_factor=upsample_factor
    )
    jax.block_until_ready(out.high_res)

    Hp, Wp = H // patch_size, W // patch_size
    assert out.low_res.shape == (B, Hp, Wp, embed_dim)
    assert out.high_res.shape == (
        B, Hp * upsample_factor, Wp * upsample_factor, embed_dim
    )
    assert out.low_res.dtype == jnp.bfloat16
    assert out.high_res.dtype == jnp.bfloat16
    assert bool(jnp.all(jnp.isfinite(out.low_res.astype(jnp.float32))))
    assert bool(jnp.all(jnp.isfinite(out.high_res.astype(jnp.float32))))

    # nearest-neighbor consistency: every high-res pixel equals its low-res source
    assert bool(
        jnp.all(
            out.high_res[:, ::upsample_factor, ::upsample_factor, :] == out.low_res
        )
    )

    # numerical check against the f32 pure-JAX reference (bf16 end-to-end tolerance)
    lr_ref, hr_ref = _reference_forward(
        x, params, patch_size=patch_size, upsample_factor=upsample_factor
    )
    assert float(jnp.max(jnp.abs(out.low_res.astype(jnp.float32) - lr_ref))) < 0.15
    assert float(jnp.max(jnp.abs(out.high_res.astype(jnp.float32) - hr_ref))) < 0.15

    print("KERNEL_OK")
</pallas_src>

<mosaic_0001>
module attributes {stable_mosaic.version = 11 : i64} {
  func.func @kernel(%arg0: i32, %arg1: memref<128x48xbf16, #tpu.memory_space<vmem>>, %arg2: memref<48x128xbf16, #tpu.memory_space<vmem>>, %arg3: memref<128x128xbf16, #tpu.memory_space<vmem>>, %arg4: memref<8x128xf32, #tpu.memory_space<vmem>>, %arg5: memref<128x128xbf16, #tpu.memory_space<vmem>>, %arg6: memref<256x256xbf16, #tpu.memory_space<vmem>>) attributes {dimension_semantics = [#tpu.dimension_semantics<parallel>], iteration_bounds = array<i64: 4>, scalar_prefetch = 0 : i64, scratch_operands = 0 : i64, tpu.core_type = #tpu.core_type<tc>, window_params = [{transform_indices = @transform_0, window_bounds = array<i64: 128, 48>}, {pipeline_mode = #tpu.pipeline_mode<synchronous>, transform_indices = @transform_1, window_bounds = array<i64: 48, 128>}, {pipeline_mode = #tpu.pipeline_mode<synchronous>, transform_indices = @transform_2, window_bounds = array<i64: 128, 128>}, {pipeline_mode = #tpu.pipeline_mode<synchronous>, transform_indices = @transform_3, window_bounds = array<i64: 8, 128>}, {transform_indices = @transform_4, window_bounds = array<i64: 128, 128>}, {transform_indices = @transform_5, window_bounds = array<i64: 256, 256>}]} {
    %c0 = arith.constant 0 : index
    %c0_0 = arith.constant 0 : index
    %0 = vector.load %arg1[%c0, %c0_0] : memref<128x48xbf16, #tpu.memory_space<vmem>>, vector<128x48xbf16>
    %c0_1 = arith.constant 0 : index
    %c0_2 = arith.constant 0 : index
    %1 = vector.load %arg2[%c0_1, %c0_2] : memref<48x128xbf16, #tpu.memory_space<vmem>>, vector<48x128xbf16>
    %cst = arith.constant dense<0.000000e+00> : vector<128x128xf32>
    %2 = tpu.matmul %0, %1, %cst {dimension_numbers = #tpu.dot_dimension_numbers<[1], [0], [0], [1], [0, 0, 1, 1], [], []>} : vector<128x48xbf16>, vector<48x128xbf16>, vector<128x128xf32> -> vector<128x128xf32>
    %c0_3 = arith.constant 0 : index
    %c0_4 = arith.constant 0 : index
    %3 = vector.load %arg4[%c0_3, %c0_4] : memref<8x128xf32, #tpu.memory_space<vmem>>, vector<1x128xf32>
    %4 = vector.broadcast %3 : vector<1x128xf32> to vector<128x128xf32>
    %5 = arith.addf %2, %4 : vector<128x128xf32>
    %cst_5 = arith.constant dense<0.000000e+00> : vector<128xf32>
    %6 = vector.multi_reduction <add>, %5, %cst_5 [1] : vector<128x128xf32> to vector<128xf32>
    %7 = vector.shape_cast %6 : vector<128xf32> to vector<128x1xf32>
    %cst_6 = arith.constant 1.280000e+02 : f32
    %8 = vector.broadcast %cst_6 : f32 to vector<128x1xf32>
    %9 = arith.divf %7, %8 : vector<128x1xf32>
    %10 = arith.mulf %5, %5 : vector<128x128xf32>
    %cst_7 = arith.constant dense<0.000000e+00> : vector<128xf32>
    %11 = vector.multi_reduction <add>, %10, %cst_7 [1] : vector<128x128xf32> to vector<128xf32>
    %12 = vector.shape_cast %11 : vector<128xf32> to vector<128x1xf32>
    %cst_8 = arith.constant 1.280000e+02 : f32
    %13 = vector.broadcast %cst_8 : f32 to vector<128x1xf32>
    %14 = arith.divf %12, %13 : vector<128x1xf32>
    %15 = arith.mulf %9, %9 : vector<128x1xf32>
    %16 = arith.subf %14, %15 : vector<128x1xf32>
    %17 = vector.broadcast %9 : vector<128x1xf32> to vector<128x128xf32>
    %18 = arith.subf %5, %17 : vector<128x128xf32>
    %cst_9 = arith.constant 9.99999974E-6 : f32
    %19 = vector.broadcast %cst_9 : f32 to vector<128x1xf32>
    %20 = arith.addf %16, %19 : vector<128x1xf32>
    %21 = math.rsqrt %20 : vector<128x1xf32>
    %22 = vector.broadcast %21 : vector<128x1xf32> to vector<128x128xf32>
    %23 = arith.mulf %18, %22 : vector<128x128xf32>
    %c1 = arith.constant 1 : index
    %c0_10 = arith.constant 0 : index
    %24 = vector.load %arg4[%c1, %c0_10] : memref<8x128xf32, #tpu.memory_space<vmem>>, vector<1x128xf32>
    %25 = vector.broadcast %24 : vector<1x128xf32> to vector<128x128xf32>
    %26 = arith.mulf %23, %25 : vector<128x128xf32>
    %c2 = arith.constant 2 : index
    %c0_11 = arith.constant 0 : index
    %27 = vector.load %arg4[%c2, %c0_11] : memref<8x128xf32, #tpu.memory_space<vmem>>, vector<1x128xf32>
    %28 = vector.broadcast %27 : vector<1x128xf32> to vector<128x128xf32>
    %29 = arith.addf %26, %28 : vector<128x128xf32>
    %30 = arith.truncf %29 : vector<128x128xf32> to vector<128x128xbf16>
    %c0_12 = arith.constant 0 : index
    %c0_13 = arith.constant 0 : index
    %31 = vector.load %arg3[%c0_12, %c0_13] : memref<128x128xbf16, #tpu.memory_space<vmem>>, vector<128x128xbf16>
    %cst_14 = arith.constant dense<0.000000e+00> : vector<128x128xf32>
    %32 = tpu.matmul %30, %31, %cst_14 {dimension_numbers = #tpu.dot_dimension_numbers<[1], [0], [0], [1], [0, 0, 1, 1], [], []>} : vector<128x128xbf16>, vector<128x128xbf16>, vector<128x128xf32> -> vector<128x128xf32>
    %c3 = arith.constant 3 : index
    %c0_15 = arith.constant 0 : index
    %33 = vector.load %arg4[%c3, %c0_15] : memref<8x128xf32, #tpu.memory_space<vmem>>, vector<1x128xf32>
    %34 = vector.broadcast %33 : vector<1x128xf32> to vector<128x128xf32>
    %35 = arith.addf %32, %34 : vector<128x128xf32>
    %36 = arith.truncf %35 : vector<128x128xf32> to vector<128x128xbf16>
    %c0_16 = arith.constant 0 : index
    %c0_17 = arith.constant 0 : index
    %37 = vector.load %arg5[%c0_16, %c0_17] : memref<128x128xbf16, #tpu.memory_space<vmem>>, vector<128x128xbf16>
    tpu.vector_store %arg5[%c0_16, %c0_17], %36 {strides = array<i32>} : memref<128x128xbf16, #tpu.memory_space<vmem>>, vector<128x128xbf16>,
    %38 = vector.extract_strided_slice %36 {offsets = [0, 0], sizes = [16, 128], strides = [1, 1]} : vector<128x128xbf16> to vector<16x128xbf16>
    %c0_18 = arith.constant 0 : index
    %c0_19 = arith.constant 0 : index
    %39 = vector.load %arg6[%c0_18, %c0_19] : memref<256x256xbf16, #tpu.memory_space<vmem>>, vector<16x128xbf16>
    tpu.vector_store %arg6[%c0_18, %c0_19], %38 {strides = array<i32>} : memref<256x256xbf16, #tpu.memory_space<vmem>>, vector<16x128xbf16>,
    %c0_20 = arith.constant 0 : index
    %c128 = arith.constant 128 : index
    %40 = vector.load %arg6[%c0_20, %c128] : memref<256x256xbf16, #tpu.memory_space<vmem>>, vector<16x128xbf16>
    tpu.vector_store %arg6[%c0_20, %c128], %38 {strides = array<i32>} : memref<256x256xbf16, #tpu.memory_space<vmem>>, vector<16x128xbf16>,
    %c16 = arith.constant 16 : index
    %c0_21 = arith.constant 0 : index
    %41 = vector.load %arg6[%c16, %c0_21] : memref<256x256xbf16, #tpu.memory_space<vmem>>, vector<16x128xbf16>
    tpu.vector_store %arg6[%c16, %c0_21], %38 {strides = array<i32>} : memref<256x256xbf16, #tpu.memory_space<vmem>>, vector<16x128xbf16>,
    %c16_22 = arith.constant 16 : index
    %c128_23 = arith.constant 128 : index
    %42 = vector.load %arg6[%c16_22, %c128_23] : memref<256x256xbf16, #tpu.memory_space<vmem>>, vector<16x128xbf16>
    tpu.vector_store %arg6[%c16_22, %c128_23], %38 {strides = array<i32>} : memref<256x256xbf16, #tpu.memory_space<vmem>>, vector<16x128xbf16>,
    %43 = vector.extract_strided_slice %36 {offsets = [16, 0], sizes = [16, 128], strides = [1, 1]} : vector<128x128xbf16> to vector<16x128xbf16>
    %c32 = arith.constant 32 : index
    %c0_24 = arith.constant 0 : index
    %44 = vector.load %arg6[%c32, %c0_24] : memref<256x256xbf16, #tpu.memory_space<vmem>>, vector<16x128xbf16>
    tpu.vector_store %arg6[%c32, %c0_24], %43 {strides = array<i32>} : memref<256x256xbf16, #tpu.memory_space<vmem>>, vector<16x128xbf16>,
    %c32_25 = arith.constant 32 : index
    %c128_26 = arith.constant 128 : index
    %45 = vector.load %arg6[%c32_25, %c128_26] : memref<256x256xbf16, #tpu.memory_space<vmem>>, vector<16x128xbf16>
    tpu.vector_store %arg6[%c32_25, %c128_26], %43 {strides = array<i32>} : memref<256x256xbf16, #tpu.memory_space<vmem>>, vector<16x128xbf16>,
    %c48 = arith.constant 48 : index
    %c0_27 = arith.constant 0 : index
    %46 = vector.load %arg6[%c48, %c0_27] : memref<256x256xbf16, #tpu.memory_space<vmem>>, vector<16x128xbf16>
    tpu.vector_store %arg6[%c48, %c0_27], %43 {strides = array<i32>} : memref<256x256xbf16, #tpu.memory_space<vmem>>, vector<16x128xbf16>,
    %c48_28 = arith.constant 48 : index
    %c128_29 = arith.constant 128 : index
    %47 = vector.load %arg6[%c48_28, %c128_29] : memref<256x256xbf16, #tpu.memory_space<vmem>>, vector<16x128xbf16>
    tpu.vector_store %arg6[%c48_28, %c128_29], %43 {strides = array<i32>} : memref<256x256xbf16, #tpu.memory_space<vmem>>, vector<16x128xbf16>,
    %48 = vector.extract_strided_slice %36 {offsets = [32, 0], sizes = [16, 128], strides = [1, 1]} : vector<128x128xbf16> to vector<16x128xbf16>
    %c64 = arith.constant 64 : index
    %c0_30 = arith.constant 0 : index
    %49 = vector.load %arg6[%c64, %c0_30] : memref<256x256xbf16, #tpu.memory_space<vmem>>, vector<16x128xbf16>
    tpu.vector_store %arg6[%c64, %c0_30], %48 {strides = array<i32>} : memref<256x256xbf16, #tpu.memory_space<vmem>>, vector<16x128xbf16>,
    %c64_31 = arith.constant 64 : index
    %c128_32 = arith.constant 128 : index
    %50 = vector.load %arg6[%c64_31, %c128_32] : memref<256x256xbf16, #tpu.memory_space<vmem>>, vector<16x128xbf16>
    tpu.vector_store %arg6[%c64_31, %c128_32], %48 {strides = array<i32>} : memref<256x256xbf16, #tpu.memory_space<vmem>>, vector<16x128xbf16>,
    %c80 = arith.constant 80 : index
    %c0_33 = arith.constant 0 : index
    %51 = vector.load %arg6[%c80, %c0_33] : memref<256x256xbf16, #tpu.memory_space<vmem>>, vector<16x128xbf16>
    tpu.vector_store %arg6[%c80, %c0_33], %48 {strides = array<i32>} : memref<256x256xbf16, #tpu.memory_space<vmem>>, vector<16x128xbf16>,
    %c80_34 = arith.constant 80 : index
    %c128_35 = arith.constant 128 : index
    %52 = vector.load %arg6[%c80_34, %c128_35] : memref<256x256xbf16, #tpu.memory_space<vmem>>, vector<16x128xbf16>
    tpu.vector_store %arg6[%c80_34, %c128_35], %48 {strides = array<i32>} : memref<256x256xbf16, #tpu.memory_space<vmem>>, vector<16x128xbf16>,
    %53 = vector.extract_strided_slice %36 {offsets = [48, 0], sizes = [16, 128], strides = [1, 1]} : vector<128x128xbf16> to vector<16x128xbf16>
    %c96 = arith.constant 96 : index
    %c0_36 = arith.constant 0 : index
    %54 = vector.load %arg6[%c96, %c0_36] : memref<256x256xbf16, #tpu.memory_space<vmem>>, vector<16x128xbf16>
    tpu.vector_store %arg6[%c96, %c0_36], %53 {strides = array<i32>} : memref<256x256xbf16, #tpu.memory_space<vmem>>, vector<16x128xbf16>,
    %c96_37 = arith.constant 96 : index
    %c128_38 = arith.constant 128 : index
    %55 = vector.load %arg6[%c96_37, %c128_38] : memref<256x256xbf16, #tpu.memory_space<vmem>>, vector<16x128xbf16>
    tpu.vector_store %arg6[%c96_37, %c128_38], %53 {strides = array<i32>} : memref<256x256xbf16, #tpu.memory_space<vmem>>, vector<16x128xbf16>,
    %c112 = arith.constant 112 : index
    %c0_39 = arith.constant 0 : index
    %56 = vector.load %arg6[%c112, %c0_39] : memref<256x256xbf16, #tpu.memory_space<vmem>>, vector<16x128xbf16>
    tpu.vector_store %arg6[%c112, %c0_39], %53 {strides = array<i32>} : memref<256x256xbf16, #tpu.memory_space<vmem>>, vector<16x128xbf16>,
    %c112_40 = arith.constant 112 : index
    %c128_41 = arith.constant 128 : index
    %57 = vector.load %arg6[%c112_40, %c128_41] : memref<256x256xbf16, #tpu.memory_space<vmem>>, vector<16x128xbf16>
    tpu.vector_store %arg6[%c112_40, %c128_41], %53 {strides = array<i32>} : memref<256x256xbf16, #tpu.memory_space<vmem>>, vector<16x128xbf16>,
    %58 = vector.extract_strided_slice %36 {offsets = [64, 0], sizes = [16, 128], strides = [1, 1]} : vector<128x128xbf16> to vector<16x128xbf16>
    %c128_42 = arith.constant 128 : index
    %c0_43 = arith.constant 0 : index
    %59 = vector.load %arg6[%c128_42, %c0_43] : memref<256x256xbf16, #tpu.memory_space<vmem>>, vector<16x128xbf16>
    tpu.vector_store %arg6[%c128_42, %c0_43], %58 {strides = array<i32>} : memref<256x256xbf16, #tpu.memory_space<vmem>>, vector<16x128xbf16>,
    %c128_44 = arith.constant 128 : index
    %c128_45 = arith.constant 128 : index
    %60 = vector.load %arg6[%c128_44, %c128_45] : memref<256x256xbf16, #tpu.memory_space<vmem>>, vector<16x128xbf16>
    tpu.vector_store %arg6[%c128_44, %c128_45], %58 {strides = array<i32>} : memref<256x256xbf16, #tpu.memory_space<vmem>>, vector<16x128xbf16>,
    %c144 = arith.constant 144 : index
    %c0_46 = arith.constant 0 : index
    %61 = vector.load %arg6[%c144, %c0_46] : memref<256x256xbf16, #tpu.memory_space<vmem>>, vector<16x128xbf16>
    tpu.vector_store %arg6[%c144, %c0_46], %58 {strides = array<i32>} : memref<256x256xbf16, #tpu.memory_space<vmem>>, vector<16x128xbf16>,
    %c144_47 = arith.constant 144 : index
    %c128_48 = arith.constant 128 : index
    %62 = vector.load %arg6[%c144_47, %c128_48] : memref<256x256xbf16, #tpu.memory_space<vmem>>, vector<16x128xbf16>
    tpu.vector_store %arg6[%c144_47, %c128_48], %58 {strides = array<i32>} : memref<256x256xbf16, #tpu.memory_space<vmem>>, vector<16x128xbf16>,
    %63 = vector.extract_strided_slice %36 {offsets = [80, 0], sizes = [16, 128], strides = [1, 1]} : vector<128x128xbf16> to vector<16x128xbf16>
    %c160 = arith.constant 160 : index
    %c0_49 = arith.constant 0 : index
    %64 = vector.load %arg6[%c160, %c0_49] : memref<256x256xbf16, #tpu.memory_space<vmem>>, vector<16x128xbf16>
    tpu.vector_store %arg6[%c160, %c0_49], %63 {strides = array<i32>} : memref<256x256xbf16, #tpu.memory_space<vmem>>, vector<16x128xbf16>,
    %c160_50 = arith.constant 160 : index
    %c128_51 = arith.constant 128 : index
    %65 = vector.load %arg6[%c160_50, %c128_51] : memref<256x256xbf16, #tpu.memory_space<vmem>>, vector<16x128xbf16>
    tpu.vector_store %arg6[%c160_50, %c128_51], %63 {strides = array<i32>} : memref<256x256xbf16, #tpu.memory_space<vmem>>, vector<16x128xbf16>,
    %c176 = arith.constant 176 : index
    %c0_52 = arith.constant 0 : index
    %66 = vector.load %arg6[%c176, %c0_52] : memref<256x256xbf16, #tpu.memory_space<vmem>>, vector<16x128xbf16>
    tpu.vector_store %arg6[%c176, %c0_52], %63 {strides = array<i32>} : memref<256x256xbf16, #tpu.memory_space<vmem>>, vector<16x128xbf16>,
    %c176_53 = arith.constant 176 : index
    %c128_54 = arith.constant 128 : index
    %67 = vector.load %arg6[%c176_53, %c128_54] : memref<256x256xbf16, #tpu.memory_space<vmem>>, vector<16x128xbf16>
    tpu.vector_store %arg6[%c176_53, %c128_54], %63 {strides = array<i32>} : memref<256x256xbf16, #tpu.memory_space<vmem>>, vector<16x128xbf16>,
    %68 = vector.extract_strided_slice %36 {offsets = [96, 0], sizes = [16, 128], strides = [1, 1]} : vector<128x128xbf16> to vector<16x128xbf16>
    %c192 = arith.constant 192 : index
    %c0_55 = arith.constant 0 : index
    %69 = vector.load %arg6[%c192, %c0_55] : memref<256x256xbf16, #tpu.memory_space<vmem>>, vector<16x128xbf16>
    tpu.vector_store %arg6[%c192, %c0_55], %68 {strides = array<i32>} : memref<256x256xbf16, #tpu.memory_space<vmem>>, vector<16x128xbf16>,
    %c192_56 = arith.constant 192 : index
    %c128_57 = arith.constant 128 : index
    %70 = vector.load %arg6[%c192_56, %c128_57] : memref<256x256xbf16, #tpu.memory_space<vmem>>, vector<16x128xbf16>
    tpu.vector_store %arg6[%c192_56, %c128_57], %68 {strides = array<i32>} : memref<256x256xbf16, #tpu.memory_space<vmem>>, vector<16x128xbf16>,
    %c208 = arith.constant 208 : index
    %c0_58 = arith.constant 0 : index
    %71 = vector.load %arg6[%c208, %c0_58] : memref<256x256xbf16, #tpu.memory_space<vmem>>, vector<16x128xbf16>
    tpu.vector_store %arg6[%c208, %c0_58], %68 {strides = array<i32>} : memref<256x256xbf16, #tpu.memory_space<vmem>>, vector<16x128xbf16>,
    %c208_59 = arith.constant 208 : index
    %c128_60 = arith.constant 128 : index
    %72 = vector.load %arg6[%c208_59, %c128_60] : memref<256x256xbf16, #tpu.memory_space<vmem>>, vector<16x128xbf16>
    tpu.vector_store %arg6[%c208_59, %c128_60], %68 {strides = array<i32>} : memref<256x256xbf16, #tpu.memory_space<vmem>>, vector<16x128xbf16>,
    %73 = vector.extract_strided_slice %36 {offsets = [112, 0], sizes = [16, 128], strides = [1, 1]} : vector<128x128xbf16> to vector<16x128xbf16>
    %c224 = arith.constant 224 : index
    %c0_61 = arith.constant 0 : index
    %74 = vector.load %arg6[%c224, %c0_61] : memref<256x256xbf16, #tpu.memory_space<vmem>>, vector<16x128xbf16>
    tpu.vector_store %arg6[%c224, %c0_61], %73 {strides = array<i32>} : memref<256x256xbf16, #tpu.memory_space<vmem>>, vector<16x128xbf16>,
    %c224_62 = arith.constant 224 : index
    %c128_63 = arith.constant 128 : index
    %75 = vector.load %arg6[%c224_62, %c128_63] : memref<256x256xbf16, #tpu.memory_space<vmem>>, vector<16x128xbf16>
    tpu.vector_store %arg6[%c224_62, %c128_63], %73 {strides = array<i32>} : memref<256x256xbf16, #tpu.memory_space<vmem>>, vector<16x128xbf16>,
    %c240 = arith.constant 240 : index
    %c0_64 = arith.constant 0 : index
    %76 = vector.load %arg6[%c240, %c0_64] : memref<256x256xbf16, #tpu.memory_space<vmem>>, vector<16x128xbf16>
    tpu.vector_store %arg6[%c240, %c0_64], %73 {strides = array<i32>} : memref<256x256xbf16, #tpu.memory_space<vmem>>, vector<16x128xbf16>,
    %c240_65 = arith.constant 240 : index
    %c128_66 = arith.constant 128 : index
    %77 = vector.load %arg6[%c240_65, %c128_66] : memref<256x256xbf16, #tpu.memory_space<vmem>>, vector<16x128xbf16>
    tpu.vector_store %arg6[%c240_65, %c128_66], %73 {strides = array<i32>} : memref<256x256xbf16, #tpu.memory_space<vmem>>, vector<16x128xbf16>,
    return
  }
  func.func @transform_0(%arg0: i32) -> (i32, i32) {
    %c0_i32 = arith.constant 0 : i32
    %c0_i32_0 = arith.constant 0 : i32
    return %arg0, %c0_i32 : i32, i32
  }
  func.func @transform_1(%arg0: i32) -> (i32, i32) {
    %c0_i32 = arith.constant 0 : i32
    %c0_i32_0 = arith.constant 0 : i32
    %c0_i32_1 = arith.constant 0 : i32
    return %c0_i32, %c0_i32_0 : i32, i32
  }
  func.func @transform_2(%arg0: i32) -> (i32, i32) {
    %c0_i32 = arith.constant 0 : i32
    %c0_i32_0 = arith.constant 0 : i32
    %c0_i32_1 = arith.constant 0 : i32
    return %c0_i32, %c0_i32_0 : i32, i32
  }
  func.func @transform_3(%arg0: i32) -> (i32, i32) {
    %c0_i32 = arith.constant 0 : i32
    %c0_i32_0 = arith.constant 0 : i32
    %c0_i32_1 = arith.constant 0 : i32
    return %c0_i32, %c0_i32_0 : i32, i32
  }
  func.func @transform_4(%arg0: i32) -> (i32, i32) {
    %c0_i32 = arith.constant 0 : i32
    %c0_i32_0 = arith.constant 0 : i32
    return %arg0, %c0_i32 : i32, i32
  }
  func.func @transform_5(%arg0: i32) -> (i32, i32) {
    %c0_i32 = arith.constant 0 : i32
    %c0_i32_0 = arith.constant 0 : i32
    return %arg0, %c0_i32 : i32, i32
  }
}

</mosaic_0001>

<llo_original>
// kernel: tpu_custom_call.1
$region0: #{tpu_custom_call.1}
  #allocation0 [shape = 'u32[]', space=smem, size = 0x4, offset = 0x4, fixed_abs, tag = 'smem constant byte address 0x4 - core index']
  #allocation1 [shape = 'u32[144,128]{1,0:T(1,128)}', space=vmem, size = 0x12000, scoped, tag = 'internal scratch']
  %s0 = inlined_call_operand.vmem [shape: bf16[512,48], index: 0, kind: input, shape index: {}]
  %s1 = inlined_call_operand.vmem [shape: bf16[48,128], index: 1, kind: input, shape index: {}]
  %s2 = inlined_call_operand.vmem [shape: bf16[128,128], index: 2, kind: input, shape index: {}]
  %s3 = inlined_call_operand.vmem [shape: f32[8,128], index: 3, kind: input, shape index: {}]
  %s4 = inlined_call_operand.hbm [shape: bf16[512,128], index: 4, kind: output, shape index: {0}]
  %s5 = inlined_call_operand.hbm [shape: bf16[1024,256], index: 5, kind: output, shape index: {1}]
  %6 = xla_tuple %s4, %s5
  %s7 = sld [smem:[#allocation0]]
  $region57: #{tpu_custom_call.1} parent=0
    _
  %s9 = ssub.s32 1, %s7
  %s10 = scalar_select 0, %s9, %s7
  $region1: #{tpu_custom_call.1} parent=0
    #allocation2 [shape = 'u8[65536]{0}', space=vmem, size = 0x10000, scoped, tag = 'output window, operand 0']
    #allocation3 [shape = 's32[2]{0}', space=sflag, size = 0x8, scoped, tag = 'scoped memory for tpu_custom_call.1']
    #allocation4 [shape = 'u8[262144]{0}', space=vmem, size = 0x40000, scoped, tag = 'output window, operand 1']
    #allocation5 [shape = 's32[2]{0}', space=sflag, size = 0x8, scoped, tag = 'scoped memory for tpu_custom_call.1']
    %11 = vsyncpa [#allocation3], 0
    %s12 = scalar_lea.sflag [#allocation3], 1
    %13 = vsyncpa %s12, 0
    %14 = vsyncpa [#allocation5], 0
    %s15 = scalar_lea.sflag [#allocation5], 1
    %16 = vsyncpa %s15, 0
    loop: start=0, step=1, limit=6
    $region2: #{tpu_custom_call.1} parent=1 // loop_pre_header
      _
    $region3: #{tpu_custom_call.1} parent=1 // loop_header
      %s18 = sphi 0, %s22
      %p19 = scmp.ge.s32.totalorder %s18, 6
      %s28 = sphi 0, %s30
      %s31 = sphi 0, %s28
      %s32 = sphi 0, %s31
      %s48 = sphi 0, %s32
      %s52 = sphi 0, %s52
      %s54 = sphi 0, %s52
      %s55 = sphi 0, %s54
      %s69 = sphi 0, %s55
      %s73 = sphi 0, %s73
      %s75 = sphi 0, %s73
      %s76 = sphi 0, %s75
      %s90 = sphi 0, %s76
      %s94 = sphi 0, %s94
      %s96 = sphi 0, %s94
      %s97 = sphi 0, %s96
      %s111 = sphi 0, %s97
      %s117 = sphi 0, %s119
      %s120 = sphi 0, %s117
      %s121 = sphi 0, %s120
      %s137 = sphi 0, %s121
      %s143 = sphi 0, %s145
      %s146 = sphi 0, %s143
      %s147 = sphi 0, %s146
      %s163 = sphi 0, %s147
    $region4: #{tpu_custom_call.1} parent=1 // loop_header_branch
      %21 = sbr.rel (%p19) target = $region8
    $region5: #{tpu_custom_call.1} parent=1 // loop_body
      %s23 = ssub.s32 %s18, 1
      %s24 = ssub.s32 %s18, 2
      %s25 = sadd.s32 %s18, 1
      %s26 = ssub.s32 %s18, %s25
      %p27 = scmp.eq.s32.totalorder %s26, 0
      %s29 = sadd.s32 %s28, 1
      %s30 = scalar_select %p27, %s28, %s29
      %p33 = pneg %p27
      %p34 = scmp.eq.s32.totalorder %s18, 3
      %p35 = por %p33, %p34
      %p36 = scmp.ne.s32.totalorder %s28, %s31
      %p37 = scmp.eq.s32.totalorder %s18, 0
      %p38 = por %p36, %p37
      %p39 = scmp.ne.s32.totalorder %s28, %s31
      %p40 = scmp.eq.s32.totalorder %s23, 3
      %p41 = por %p39, %p40
      %p42 = scmp.ne.s32.totalorder %s31, %s32
      %p43 = scmp.eq.s32.totalorder %s23, 0
      %p44 = por %p42, %p43
      %p45 = scmp.ne.s32.totalorder %s31, %s32
      %p46 = scmp.eq.s32.totalorder %s24, 3
      %p47 = por %p45, %p46
      %p49 = scmp.ne.s32.totalorder %s32, %s48
      %p50 = scmp.eq.s32.totalorder %s24, 0
      %p51 = por %p49, %p50
      %s53 = sadd.s32 %s52, 1
      %p56 = scmp.eq.s32.totalorder %s18, 3
      %p57 = scmp.ne.s32.totalorder %s52, %s54
      %p58 = scmp.eq.s32.totalorder %s18, 0
      %p59 = por %p57, %p58
      %p60 = scmp.ne.s32.totalorder %s52, %s54
      %p61 = scmp.eq.s32.totalorder %s23, 3
      %p62 = por %p60, %p61
      %p63 = scmp.ne.s32.totalorder %s54, %s55
      %p64 = scmp.eq.s32.totalorder %s23, 0
      %p65 = por %p63, %p64
      %p66 = scmp.ne.s32.totalorder %s54, %s55
      %p67 = scmp.eq.s32.totalorder %s24, 3
      %p68 = por %p66, %p67
      %p70 = scmp.ne.s32.totalorder %s55, %s69
      %p71 = scmp.eq.s32.totalorder %s24, 0
      %p72 = por %p70, %p71
      %s74 = sadd.s32 %s73, 1
      %p77 = scmp.eq.s32.totalorder %s18, 3
      %p78 = scmp.ne.s32.totalorder %s73, %s75
      %p79 = scmp.eq.s32.totalorder %s18, 0
      %p80 = por %p78, %p79
      %p81 = scmp.ne.s32.totalorder %s73, %s75
      %p82 = scmp.eq.s32.totalorder %s23, 3
      %p83 = por %p81, %p82
      %p84 = scmp.ne.s32.totalorder %s75, %s76
      %p85 = scmp.eq.s32.totalorder %s23, 0
      %p86 = por %p84, %p85
      %p87 = scmp.ne.s32.totalorder %s75, %s76
      %p88 = scmp.eq.s32.totalorder %s24, 3
      %p89 = por %p87, %p88
      %p91 = scmp.ne.s32.totalorder %s76, %s90
      %p92 = scmp.eq.s32.totalorder %s24, 0
      %p93 = por %p91, %p92
      %s95 = sadd.s32 %s94, 1
      %p98 = scmp.eq.s32.totalorder %s18, 3
      %p99 = scmp.ne.s32.totalorder %s94, %s96
      %p100 = scmp.eq.s32.totalorder %s18, 0
      %p101 = por %p99, %p100
      %p102 = scmp.ne.s32.totalorder %s94, %s96
      %p103 = scmp.eq.s32.totalorder %s23, 3
      %p104 = por %p102, %p103
      %p105 = scmp.ne.s32.totalorder %s96, %s97
      %p106 = scmp.eq.s32.totalorder %s23, 0
      %p107 = por %p105, %p106
      %p108 = scmp.ne.s32.totalorder %s96, %s97
      %p109 = scmp.eq.s32.totalorder %s24, 3
      %p110 = por %p108, %p109
      %p112 = scmp.ne.s32.totalorder %s97, %s111
      %p113 = scmp.eq.s32.totalorder %s24, 0
      %p114 = por %p112, %p113
      %s115 = ssub.s32 %s18, %s25
      %p116 = scmp.eq.s32.totalorder %s115, 0
      %s118 = sadd.s32 %s117, 1
      %s119 = scalar_select %p116, %s117, %s118
      %p122 = pneg %p116
      %p123 = scmp.eq.s32.totalorder %s18, 3
      %p124 = por %p122, %p123
      %p125 = scmp.ne.s32.totalorder %s117, %s120
      %p126 = scmp.eq.s32.totalorder %s18, 0
      %p127 = por %p125, %p126
      %p128 = scmp.ne.s32.totalorder %s117, %s120
      %p129 = scmp.eq.s32.totalorder %s23, 3
      %p130 = por %p128, %p129
      %p131 = scmp.ne.s32.totalorder %s120, %s121
      %p132 = scmp.eq.s32.totalorder %s23, 0
      %p133 = por %p131, %p132
      %p134 = scmp.ne.s32.totalorder %s120, %s121
      %p135 = scmp.eq.s32.totalorder %s24, 3
      %p136 = por %p134, %p135
      %p138 = scmp.ne.s32.totalorder %s121, %s137
      %p139 = scmp.eq.s32.totalorder %s24, 0
      %p140 = por %p138, %p139
      %s141 = ssub.s32 %s18, %s25
      %p142 = scmp.eq.s32.totalorder %s141, 0
      %s144 = sadd.s32 %s143, 1
      %s145 = scalar_select %p142, %s143, %s144
      %p148 = pneg %p142
      %p149 = scmp.eq.s32.totalorder %s18, 3
      %p150 = por %p148, %p149
      %p151 = scmp.ne.s32.totalorder %s143, %s146
      %p152 = scmp.eq.s32.totalorder %s18, 0
      %p153 = por %p151, %p152
      %p154 = scmp.ne.s32.totalorder %s143, %s146
      %p155 = scmp.eq.s32.totalorder %s23, 3
      %p156 = por %p154, %p155
      %p157 = scmp.ne.s32.totalorder %s146, %s147
      %p158 = scmp.eq.s32.totalorder %s23, 0
      %p159 = por %p157, %p158
      %p160 = scmp.ne.s32.totalorder %s146, %s147
      %p161 = scmp.eq.s32.totalorder %s24, 3
      %p162 = por %p160, %p161
      %p164 = scmp.ne.s32.totalorder %s147, %s163
      %p165 = scmp.eq.s32.totalorder %s24, 0
      %p166 = por %p164, %p165
      %p167 = scmp.le.s32.totalorder 1, %s18
      %p168 = scmp.lt.s32.totalorder %s18, 5
      %p169 = pnand %p167, %p168
      %p170 = pneg %p169
      // Predicated region
      $region9: #{tpu_custom_call.1} parent=5 // pred_check
        _
      $region10: #{tpu_custom_call.1} parent=5 // pred_check_branch
        %172 = sbr.rel (%p169) target = $region12
      $region11: #{tpu_custom_call.1} parent=5 // pred_region
        %s173 = ssub.s32 %s18, 1
        // Predicated region
        $region13: #{tpu_custom_call.1} parent=11 // pred_check
          %p174 = pneg %p65
        $region14: #{tpu_custom_call.1} parent=11 // pred_check_branch
          %176 = sbr.rel (%p174) target = $region16
        $region15: #{tpu_custom_call.1} parent=11 // pred_region
          _
        $region16: #{tpu_custom_call.1} parent=11 // pred_fallthru
          _
        // Predicated region
        $region17: #{tpu_custom_call.1} parent=11 // pred_check
          %p177 = pneg %p86
        $region18: #{tpu_custom_call.1} parent=11 // pred_check_branch
          %179 = sbr.rel (%p177) target = $region20
        $region19: #{tpu_custom_call.1} parent=11 // pred_region
          _
        $region20: #{tpu_custom_call.1} parent=11 // pred_fallthru
          _
        // Predicated region
        $region21: #{tpu_custom_call.1} parent=11 // pred_check
          %p180 = pneg %p107
        $region22: #{tpu_custom_call.1} parent=11 // pred_check_branch
          %182 = sbr.rel (%p180) target = $region24
        $region23: #{tpu_custom_call.1} parent=11 // pred_region
          _
        $region24: #{tpu_custom_call.1} parent=11 // pred_fallthru
          _
      $region12: #{tpu_custom_call.1} parent=5 // pred_fallthru
        _
      %p183 = scmp.lt.s32.totalorder %s18, 4
      // Predicated region
      $region25: #{tpu_custom_call.1} parent=5 // pred_check
        %p184 = pneg %p183
      $region26: #{tpu_custom_call.1} parent=5 // pred_check_branch
        %186 = sbr.rel (%p184) target = $region28
      $region27: #{tpu_custom_call.1} parent=5 // pred_region
        // Predicated region
        $region29: #{tpu_custom_call.1} parent=27 // pred_check
          %p187 = pneg %p38
        $region30: #{tpu_custom_call.1} parent=27 // pred_check_branch
          %189 = sbr.rel (%p187) target = $region32
        $region31: #{tpu_custom_call.1} parent=27 // pred_region
          %s190 = smul.u32 16, %s18
          %p191 = scmp.lt.s32.totalorder %s190, 63
          %s192 = scalar_select %p191, %s190, 63
          %s193 = smul.addr %s192, 4
          %s194 = scalar_lea.vmem %s0, %s193
          %s195 = smul.u32 16, %s18
        $region32: #{tpu_custom_call.1} parent=27 // pred_fallthru
          _
      $region28: #{tpu_custom_call.1} parent=5 // pred_fallthru
        _
      %p196 = scmp.le.s32.totalorder 1, %s18
      %p197 = scmp.lt.s32.totalorder %s18, 5
      %p198 = pnand %p196, %p197
      %p199 = pneg %p198
      // Predicated region
      $region33: #{tpu_custom_call.1} parent=5 // pred_check
        _
      $region34: #{tpu_custom_call.1} parent=5 // pred_check_branch
        %201 = sbr.rel (%p198) target = $region36
      $region35: #{tpu_custom_call.1} parent=5 // pred_region
        %s202 = ssub.s32 %s18, 1
        %s203 = smul.u32 16, %s23
        %p204 = scmp.lt.s32.totalorder %s203, 63
        %s205 = scalar_select %p204, %s203, 63
        %s206 = smul.addr %s205, 4
        %s207 = scalar_lea.vmem %s0, %s206
        %p208 = pneg %p44
        %p209 = pneg %p41
        %p210 = pneg %p65
        %p211 = pneg %p62
        %p212 = pneg %p86
        %p213 = pneg %p83
        %p214 = pneg %p107
        %p215 = pneg %p104
        %p216 = pneg %p133
        %p217 = pneg %p130
        %s218 = sand.u32 %s120, 1
        %s219 = scalar_lea.sflag [#allocation3], %s218
        %s220 = sand.u32 %s120, 1
        %s221 = smul.addr %s220, 64
        %s222 = scalar_lea.vmem [#allocation2], %s221
        %p223 = pneg %p159
        %p224 = pneg %p156
        %s225 = sand.u32 %s146, 1
        %s226 = scalar_lea.sflag [#allocation5], %s225
        %s227 = sand.u32 %s146, 1
        %s228 = smul.addr %s227, 256
        %s229 = scalar_lea.vmem [#allocation4], %s228
        %s230 = smul.u32 16, %s23
        %p231 = scmp.lt.s32.totalorder %s230, 63
        %s232 = scalar_select %p231, %s230, 63
        %s233 = smul.addr %s232, 4
        %s234 = scalar_lea.vmem %s0, %s233
        %s235 = smul.u32 16, %s23
        %s236 = smul.u32 16, %s23
        %s237 = smul.u32 32, %s23
        %v239 = vld [vmem:[%s234] sm:$0xf]
        %v240 = vld [vmem:[%s234 + $0x4] sm:$0xf]
        %v241 = vld [vmem:[%s234 + $0x8] sm:$0xf]
        %v242 = vld [vmem:[%s234 + $0xc] sm:$0xf]
        %v243 = vld [vmem:[%s234 + $0x10] sm:$0xf]
        %v244 = vld [vmem:[%s234 + $0x14] sm:$0xf]
        %v245 = vld [vmem:[%s234 + $0x18] sm:$0xf]
        %v246 = vld [vmem:[%s234 + $0x1c] sm:$0xf]
        %v247 = vld [vmem:[%s234 + $0x20] sm:$0xf]
        %v248 = vld [vmem:[%s234 + $0x24] sm:$0xf]
        %v249 = vld [vmem:[%s234 + $0x28] sm:$0xf]
        %v250 = vld [vmem:[%s234 + $0x2c] sm:$0xf]
        %v251 = vld [vmem:[%s234 + $0x30] sm:$0xf]
        %v252 = vld [vmem:[%s234 + $0x34] sm:$0xf]
        %v253 = vld [vmem:[%s234 + $0x38] sm:$0xf]
        %v254 = vld [vmem:[%s234 + $0x3c] sm:$0xf]
        %v255 = vld [vmem:[%s1] sm:$0xf]
        %v256 = vld [vmem:[%s1 + $0x4] sm:$0xf]
        %v257 = vld [vmem:[%s1 + $0x8] sm:$0xf]
        %v258 = vld [vmem:[%s1 + $0xc] sm:$0xf]
        %v259 = vld [vmem:[%s1 + $0x10] sm:$0xf]
        %v260 = vld [vmem:[%s1 + $0x14] sm:$0xf]
        %v261 = vld [vmem:[%s3] sm:$0x1]
        %v262 = vlaneseq
        %v263 = vshrl.u32 %v262, 7
        %v264 = vsub.s32 0, %v263
        %v265 = vrot.slane %v261, %v264
        %v282 = vunpack.c.l.b16 %v239
        %v283 = vunpack.c.l.b16 %v240
        %v284 = vunpack.c.l.b16 %v241
        %v285 = vunpack.c.l.b16 %v242
        %v286 = vunpack.c.l.b16 %v243
        %v287 = vunpack.c.l.b16 %v244
        %v288 = vunpack.c.l.b16 %v245
        %v289 = vunpack.c.l.b16 %v246
        %v290 = vunpack.c.l.b16 %v247
        %v291 = vunpack.c.l.b16 %v248
        %v292 = vunpack.c.l.b16 %v249
        %v293 = vunpack.c.l.b16 %v250
        %v294 = vunpack.c.l.b16 %v251
        %v295 = vunpack.c.l.b16 %v252
        %v296 = vunpack.c.l.b16 %v253
        %v297 = vunpack.c.l.b16 %v254
        %v298 = vpack.c.b16 %v283, %v282
        %v299 = vpack.c.b16 %v285, %v284
        %v300 = vpack.c.b16 %v287, %v286
        %v301 = vpack.c.b16 %v289, %v288
        %v302 = vpack.c.b16 %v291, %v290
        %v303 = vpack.c.b16 %v293, %v292
        %v304 = vpack.c.b16 %v295, %v294
        %v305 = vpack.c.b16 %v297, %v296
        %v312 = vunpack.c.l.b16 %v255
        %v313 = vunpack.c.l.b16 %v256
        %v314 = vunpack.c.l.b16 %v257
        %v315 = vunpack.c.l.b16 %v258
        %v316 = vunpack.c.l.b16 %v259
        %v317 = vunpack.c.l.b16 %v260
        %v318 = vpack.c.b16 %v313, %v312
        %v319 = vpack.c.b16 %v315, %v314
        %v320 = vpack.c.b16 %v317, %v316
        %vm324 = vcmask 392192
        %v326 = vsel %vm324, %v298, 0
        %v329 = vsel %vm324, %v299, 0
        %v332 = vsel %vm324, %v300, 0
        %v335 = vsel %vm324, %v301, 0
        %v338 = vsel %vm324, %v302, 0
        %v341 = vsel %vm324, %v303, 0
        %v344 = vsel %vm324, %v304, 0
        %v347 = vsel %vm324, %v305, 0
        %349 = vmatprep.subr.bf16.mxu0 0
        %350 = vmatpush1.bf16.msra.mxu0 0
        %351 = vmatprep.subr.bf16.mxu0 0
        %352 = vmatpush1.bf16.msra.mxu0 0
        %353 = vmatprep.subr.bf16.mxu0 0
        %354 = vmatpush1.bf16.msra.mxu0 0
        %355 = vmatprep.subr.bf16.mxu0 0
        %356 = vmatpush1.bf16.msra.mxu0 0
        %357 = vmatprep.subr.bf16.mxu0 0
        %358 = vmatpush1.bf16.msra.mxu0 0
        %359 = vmatprep.subr.bf16.mxu0 0
        %360 = vmatpush1.bf16.msra.mxu0 %v320
        %361 = vmatprep.subr.bf16.mxu0 0
        %362 = vmatpush1.bf16.msra.mxu0 %v319
        %363 = vmatprep.subr.bf16.mxu0 0
        %364 = vmatpush1.bf16.msra.mxu0 %v318
        %365 = vmatprep.subr.bf16.mxu0 0
        %366 = vmatpush2.bf16.msra.mxu0 0
        %367 = vmatprep.subr.bf16.mxu0 0
        %368 = vmatpush2.bf16.msra.mxu0 0
        %369 = vmatprep.subr.bf16.mxu0 0
        %370 = vmatpush2.bf16.msra.mxu0 0
        %371 = vmatprep.subr.bf16.mxu0 0
        %372 = vmatpush2.bf16.msra.mxu0 0
        %373 = vmatprep.subr.bf16.mxu0 0
        %374 = vmatpush2.bf16.msra.mxu0 0
        %375 = vmatprep.subr.bf16.mxu0 0
        %376 = vmatpush2.bf16.msra.mxu0 0
        %377 = vmatprep.subr.bf16.mxu0 0
        %378 = vmatpush2.bf16.msra.mxu0 0
        %379 = vmatprep.subr.bf16.mxu0 0
        %380 = vmatpush2.bf16.msra.mxu0 0
        %381 = vmatprep.mubr.bf16.mxu0 0
        %382 = vmatmul.mubr.bf16.gmra.mxu0 %v326
        %v383 = vpop.f32.mrf.mxu0
        %v384 = vadd.f32 %v265, %v383
        %v385 = vpop.f32.mrf.mxu0
        %v386 = vpop.f32.mrf.mxu0
        %v387 = vadd.f32 %v265, %v386
        %v388 = vpop.f32.mrf.mxu0
        %389 = vmatprep.mubr.bf16.mxu0 0
        %390 = vmatmul.mubr.bf16.gmra.mxu0 %v329
        %v391 = vpop.f32.mrf.mxu0
        %v392 = vadd.f32 %v265, %v391
        %v393 = vpop.f32.mrf.mxu0
        %v394 = vpop.f32.mrf.mxu0
        %v395 = vadd.f32 %v265, %v394
        %v396 = vpop.f32.mrf.mxu0
        %397 = vmatprep.mubr.bf16.mxu0 0
        %398 = vmatmul.mubr.bf16.gmra.mxu0 %v332
        %v399 = vpop.f32.mrf.mxu0
        %v400 = vadd.f32 %v265, %v399
        %v401 = vpop.f32.mrf.mxu0
        %v402 = vpop.f32.mrf.mxu0
        %v403 = vadd.f32 %v265, %v402
        %v404 = vpop.f32.mrf.mxu0
        %405 = vmatprep.mubr.bf16.mxu0 0
        %406 = vmatmul.mubr.bf16.gmra.mxu0 %v335
        %v407 = vpop.f32.mrf.mxu0
        %v408 = vadd.f32 %v265, %v407
        %v409 = vpop.f32.mrf.mxu0
        %v410 = vpop.f32.mrf.mxu0
        %v411 = vadd.f32 %v265, %v410
        %v412 = vpop.f32.mrf.mxu0
        %413 = vmatprep.mubr.bf16.mxu0 0
        %414 = vmatmul.mubr.bf16.gmra.mxu0 %v338
        %v415 = vpop.f32.mrf.mxu0
        %v416 = vadd.f32 %v265, %v415
        %v417 = vpop.f32.mrf.mxu0
        %v418 = vpop.f32.mrf.mxu0
        %v419 = vadd.f32 %v265, %v418
        %v420 = vpop.f32.mrf.mxu0
        %421 = vmatprep.mubr.bf16.mxu0 0
        %422 = vmatmul.mubr.bf16.gmra.mxu0 %v341
        %v423 = vpop.f32.mrf.mxu0
        %v424 = vadd.f32 %v265, %v423
        %v425 = vpop.f32.mrf.mxu0
        %v426 = vpop.f32.mrf.mxu0
        %v427 = vadd.f32 %v265, %v426
        %v428 = vpop.f32.mrf.mxu0
        %429 = vmatprep.mubr.bf16.mxu0 0
        %430 = vmatmul.mubr.bf16.gmra.mxu0 %v344
        %v431 = vpop.f32.mrf.mxu0
        %v432 = vadd.f32 %v265, %v431
        %v433 = vpop.f32.mrf.mxu0
        %v434 = vpop.f32.mrf.mxu0
        %v435 = vadd.f32 %v265, %v434
        %v436 = vpop.f32.mrf.mxu0
        %437 = vmatprep.mubr.bf16.mxu0 0
        %438 = vmatmul.mubr.bf16.gmra.mxu0 %v347
        %v439 = vpop.f32.mrf.mxu0
        %v440 = vadd.f32 %v265, %v439
        %v441 = vpop.f32.mrf.mxu0
        %v442 = vpop.f32.mrf.mxu0
        %v443 = vadd.f32 %v265, %v442
        %v444 = vpop.f32.mrf.mxu0
        %445 = vdwg.mxu0
        %446 = vadd.xlane.f32.xlu0 %v384
        %v447 = vpop.xlane.xlu0 %446
        %448 = vadd.xlane.f32.xlu0 %v387
        %v449 = vpop.xlane.xlu0 %448
        %450 = vadd.xlane.f32.xlu0 %v392
        %v451 = vpop.xlane.xlu0 %450
        %452 = vadd.xlane.f32.xlu0 %v395
        %v453 = vpop.xlane.xlu0 %452
        %454 = vadd.xlane.f32.xlu0 %v400
        %v455 = vpop.xlane.xlu0 %454
        %456 = vadd.xlane.f32.xlu0 %v403
        %v457 = vpop.xlane.xlu0 %456
        %458 = vadd.xlane.f32.xlu0 %v408
        %v459 = vpop.xlane.xlu0 %458
        %460 = vadd.xlane.f32.xlu0 %v411
        %v461 = vpop.xlane.xlu0 %460
        %462 = vadd.xlane.f32.xlu0 %v416
        %v463 = vpop.xlane.xlu0 %462
        %464 = vadd.xlane.f32.xlu0 %v419
        %v465 = vpop.xlane.xlu0 %464
        %466 = vadd.xlane.f32.xlu0 %v424
        %v467 = vpop.xlane.xlu0 %466
        %468 = vadd.xlane.f32.xlu0 %v427
        %v469 = vpop.xlane.xlu0 %468
        %470 = vadd.xlane.f32.xlu0 %v432
        %v471 = vpop.xlane.xlu0 %470
        %472 = vadd.xlane.f32.xlu0 %v435
        %v473 = vpop.xlane.xlu0 %472
        %474 = vadd.xlane.f32.xlu0 %v440
        %v475 = vpop.xlane.xlu0 %474
        %476 = vadd.xlane.f32.xlu0 %v443
        %v477 = vpop.xlane.xlu0 %476
        %v478 = vrcp.pop 128.0
        %v479 = vmul.f32 %v447, %v478
        %v480 = vmul.f32 %v449, %v478
        %v481 = vmul.f32 %v451, %v478
        %v482 = vmul.f32 %v453, %v478
        %v483 = vmul.f32 %v455, %v478
        %v484 = vmul.f32 %v457, %v478
        %v485 = vmul.f32 %v459, %v478
        %v486 = vmul.f32 %v461, %v478
        %v487 = vmul.f32 %v463, %v478
        %v488 = vmul.f32 %v465, %v478
        %v489 = vmul.f32 %v467, %v478
        %v490 = vmul.f32 %v469, %v478
        %v491 = vmul.f32 %v471, %v478
        %v492 = vmul.f32 %v473, %v478
        %v493 = vmul.f32 %v475, %v478
        %v494 = vmul.f32 %v477, %v478
        %v495 = vmul.f32 %v384, %v384
        %v496 = vmul.f32 %v387, %v387
        %v497 = vmul.f32 %v392, %v392
        %v498 = vmul.f32 %v395, %v395
        %v499 = vmul.f32 %v400, %v400
        %v500 = vmul.f32 %v403, %v403
        %v501 = vmul.f32 %v408, %v408
        %v502 = vmul.f32 %v411, %v411
        %v503 = vmul.f32 %v416, %v416
        %v504 = vmul.f32 %v419, %v419
        %v505 = vmul.f32 %v424, %v424
        %v506 = vmul.f32 %v427, %v427
        %v507 = vmul.f32 %v432, %v432
        %v508 = vmul.f32 %v435, %v435
        %v509 = vmul.f32 %v440, %v440
        %v510 = vmul.f32 %v443, %v443
        %511 = vadd.xlane.f32.xlu0 %v495
        %v512 = vpop.xlane.xlu0 %511
        %513 = vadd.xlane.f32.xlu0 %v496
        %v514 = vpop.xlane.xlu0 %513
        %515 = vadd.xlane.f32.xlu0 %v497
        %v516 = vpop.xlane.xlu0 %515
        %517 = vadd.xlane.f32.xlu0 %v498
        %v518 = vpop.xlane.xlu0 %517
        %519 = vadd.xlane.f32.xlu0 %v499
        %v520 = vpop.xlane.xlu0 %519
        %521 = vadd.xlane.f32.xlu0 %v500
        %v522 = vpop.xlane.xlu0 %521
        %523 = vadd.xlane.f32.xlu0 %v501
        %v524 = vpop.xlane.xlu0 %523
        %525 = vadd.xlane.f32.xlu0 %v502
        %v526 = vpop.xlane.xlu0 %525
        %527 = vadd.xlane.f32.xlu0 %v503
        %v528 = vpop.xlane.xlu0 %527
        %529 = vadd.xlane.f32.xlu0 %v504
        %v530 = vpop.xlane.xlu0 %529
        %531 = vadd.xlane.f32.xlu0 %v505
        %v532 = vpop.xlane.xlu0 %531
        %533 = vadd.xlane.f32.xlu0 %v506
        %v534 = vpop.xlane.xlu0 %533
        %535 = vadd.xlane.f32.xlu0 %v507
        %v536 = vpop.xlane.xlu0 %535
        %537 = vadd.xlane.f32.xlu0 %v508
        %v538 = vpop.xlane.xlu0 %537
        %539 = vadd.xlane.f32.xlu0 %v509
        %v540 = vpop.xlane.xlu0 %539
        %541 = vadd.xlane.f32.xlu0 %v510
        %v542 = vpop.xlane.xlu0 %541
        %v543 = vmul.f32 %v512, %v478
        %v544 = vmul.f32 %v514, %v478
        %v545 = vmul.f32 %v516, %v478
        %v546 = vmul.f32 %v518, %v478
        %v547 = vmul.f32 %v520, %v478
        %v548 = vmul.f32 %v522, %v478
        %v549 = vmul.f32 %v524, %v478
        %v550 = vmul.f32 %v526, %v478
        %v551 = vmul.f32 %v528, %v478
        %v552 = vmul.f32 %v530, %v478
        %v553 = vmul.f32 %v532, %v478
        %v554 = vmul.f32 %v534, %v478
        %v555 = vmul.f32 %v536, %v478
        %v556 = vmul.f32 %v538, %v478
        %v557 = vmul.f32 %v540, %v478
        %v558 = vmul.f32 %v542, %v478
        %v559 = vmul.f32 %v479, %v479
        %v560 = vmul.f32 %v480, %v480
        %v561 = vmul.f32 %v481, %v481
        %v562 = vmul.f32 %v482, %v482
        %v563 = vmul.f32 %v483, %v483
        %v564 = vmul.f32 %v484, %v484
        %v565 = vmul.f32 %v485, %v485
        %v566 = vmul.f32 %v486, %v486
        %v567 = vmul.f32 %v487, %v487
        %v568 = vmul.f32 %v488, %v488
        %v569 = vmul.f32 %v489, %v489
        %v570 = vmul.f32 %v490, %v490
        %v571 = vmul.f32 %v491, %v491
        %v572 = vmul.f32 %v492, %v492
        %v573 = vmul.f32 %v493, %v493
        %v574 = vmul.f32 %v494, %v494
        %v575 = vsub.f32 %v543, %v559
        %v576 = vsub.f32 %v544, %v560
        %v577 = vsub.f32 %v545, %v561
        %v578 = vsub.f32 %v546, %v562
        %v579 = vsub.f32 %v547, %v563
        %v580 = vsub.f32 %v548, %v564
        %v581 = vsub.f32 %v549, %v565
        %v582 = vsub.f32 %v550, %v566
        %v583 = vsub.f32 %v551, %v567
        %v584 = vsub.f32 %v552, %v568
        %v585 = vsub.f32 %v553, %v569
        %v586 = vsub.f32 %v554, %v570
        %v587 = vsub.f32 %v555, %v571
        %v588 = vsub.f32 %v556, %v572
        %v589 = vsub.f32 %v557, %v573
        %v590 = vsub.f32 %v558, %v574
        %v591 = vsub.f32 %v384, %v479
        %v592 = vsub.f32 %v387, %v480
        %v593 = vsub.f32 %v392, %v481
        %v594 = vsub.f32 %v395, %v482
        %v595 = vsub.f32 %v400, %v483
        %v596 = vsub.f32 %v403, %v484
        %v597 = vsub.f32 %v408, %v485
        %v598 = vsub.f32 %v411, %v486
        %v599 = vsub.f32 %v416, %v487
        %v600 = vsub.f32 %v419, %v488
        %v601 = vsub.f32 %v424, %v489
        %v602 = vsub.f32 %v427, %v490
        %v603 = vsub.f32 %v432, %v491
        %v604 = vsub.f32 %v435, %v492
        %v605 = vsub.f32 %v440, %v493
        %v606 = vsub.f32 %v443, %v494
        %v607 = vadd.f32 %v575, 1e-05
        %v608 = vadd.f32 %v576, 1e-05
        %v609 = vadd.f32 %v577, 1e-05
        %v610 = vadd.f32 %v578, 1e-05
        %v611 = vadd.f32 %v579, 1e-05
        %v612 = vadd.f32 %v580, 1e-05
        %v613 = vadd.f32 %v581, 1e-05
        %v614 = vadd.f32 %v582, 1e-05
        %v615 = vadd.f32 %v583, 1e-05
        %v616 = vadd.f32 %v584, 1e-05
        %v617 = vadd.f32 %v585, 1e-05
        %v618 = vadd.f32 %v586, 1e-05
        %v619 = vadd.f32 %v587, 1e-05
        %v620 = vadd.f32 %v588, 1e-05
        %v621 = vadd.f32 %v589, 1e-05
        %v622 = vadd.f32 %v590, 1e-05
        %v623 = vrsqrt.pop %v607
        %v624 = vrsqrt.pop %v608
        %v625 = vrsqrt.pop %v609
        %v626 = vrsqrt.pop %v610
        %v627 = vrsqrt.pop %v611
        %v628 = vrsqrt.pop %v612
        %v629 = vrsqrt.pop %v613
        %v630 = vrsqrt.pop %v614
        %v631 = vrsqrt.pop %v615
        %v632 = vrsqrt.pop %v616
        %v633 = vrsqrt.pop %v617
        %v634 = vrsqrt.pop %v618
        %v635 = vrsqrt.pop %v619
        %v636 = vrsqrt.pop %v620
        %v637 = vrsqrt.pop %v621
        %v638 = vrsqrt.pop %v622
        %v639 = vmul.f32 %v591, %v623
        %v640 = vmul.f32 %v592, %v624
        %v641 = vmul.f32 %v593, %v625
        %v642 = vmul.f32 %v594, %v626
        %v643 = vmul.f32 %v595, %v627
        %v644 = vmul.f32 %v596, %v628
        %v645 = vmul.f32 %v597, %v629
        %v646 = vmul.f32 %v598, %v630
        %v647 = vmul.f32 %v599, %v631
        %v648 = vmul.f32 %v600, %v632
        %v649 = vmul.f32 %v601, %v633
        %v650 = vmul.f32 %v602, %v634
        %v651 = vmul.f32 %v603, %v635
        %v652 = vmul.f32 %v604, %v636
        %v653 = vmul.f32 %v605, %v637
        %v654 = vmul.f32 %v606, %v638
        %v655 = vld [vmem:[%s3 + $0x1] sm:$0x1]
        %v656 = vlaneseq
        %v657 = vshrl.u32 %v656, 7
        %v658 = vsub.s32 0, %v657
        %v659 = vrot.slane %v655, %v658
        %v660 = vmul.f32 %v639, %v659
        %v661 = vmul.f32 %v640, %v659
        %v662 = vmul.f32 %v641, %v659
        %v663 = vmul.f32 %v642, %v659
        %v664 = vmul.f32 %v643, %v659
        %v665 = vmul.f32 %v644, %v659
        %v666 = vmul.f32 %v645, %v659
        %v667 = vmul.f32 %v646, %v659
        %v668 = vmul.f32 %v647, %v659
        %v669 = vmul.f32 %v648, %v659
        %v670 = vmul.f32 %v649, %v659
        %v671 = vmul.f32 %v650, %v659
        %v672 = vmul.f32 %v651, %v659
        %v673 = vmul.f32 %v652, %v659
        %v674 = vmul.f32 %v653, %v659
        %v675 = vmul.f32 %v654, %v659
        %v676 = vld [vmem:[%s3 + $0x2] sm:$0x1]
        %v677 = vlaneseq
        %v678 = vshrl.u32 %v677, 7
        %v679 = vsub.s32 0, %v678
        %v680 = vrot.slane %v676, %v679
        %v681 = vadd.f32 %v660, %v680
        %v682 = vadd.f32 %v661, %v680
        %v683 = vadd.f32 %v662, %v680
        %v684 = vadd.f32 %v663, %v680
        %v685 = vadd.f32 %v664, %v680
        %v686 = vadd.f32 %v665, %v680
        %v687 = vadd.f32 %v666, %v680
        %v688 = vadd.f32 %v667, %v680
        %v689 = vadd.f32 %v668, %v680
        %v690 = vadd.f32 %v669, %v680
        %v691 = vadd.f32 %v670, %v680
        %v692 = vadd.f32 %v671, %v680
        %v693 = vadd.f32 %v672, %v680
        %v694 = vadd.f32 %v673, %v680
        %v695 = vadd.f32 %v674, %v680
        %v696 = vadd.f32 %v675, %v680
        %v697 = vpack.c.bf16 %v682, %v681
        %v698 = vpack.c.bf16 %v684, %v683
        %v699 = vpack.c.bf16 %v686, %v685
        %v700 = vpack.c.bf16 %v688, %v687
        %v701 = vpack.c.bf16 %v690, %v689
        %v702 = vpack.c.bf16 %v692, %v691
        %v703 = vpack.c.bf16 %v694, %v693
        %v704 = vpack.c.bf16 %v696, %v695
        %v705 = vld [vmem:[%s2] sm:$0xf]
        %v706 = vld [vmem:[%s2 + $0x4] sm:$0xf]
        %v707 = vld [vmem:[%s2 + $0x8] sm:$0xf]
        %v708 = vld [vmem:[%s2 + $0xc] sm:$0xf]
        %v709 = vld [vmem:[%s2 + $0x10] sm:$0xf]
        %v710 = vld [vmem:[%s2 + $0x14] sm:$0xf]
        %v711 = vld [vmem:[%s2 + $0x18] sm:$0xf]
        %v712 = vld [vmem:[%s2 + $0x1c] sm:$0xf]
        %v713 = vld [vmem:[%s2 + $0x20] sm:$0xf]
        %v714 = vld [vmem:[%s2 + $0x24] sm:$0xf]
        %v715 = vld [vmem:[%s2 + $0x28] sm:$0xf]
        %v716 = vld [vmem:[%s2 + $0x2c] sm:$0xf]
        %v717 = vld [vmem:[%s2 + $0x30] sm:$0xf]
        %v718 = vld [vmem:[%s2 + $0x34] sm:$0xf]
        %v719 = vld [vmem:[%s2 + $0x38] sm:$0xf]
        %v720 = vld [vmem:[%s2 + $0x3c] sm:$0xf]
        %v721 = vld [vmem:[%s3 + $0x3] sm:$0x1]
        %v722 = vlaneseq
        %v723 = vshrl.u32 %v722, 7
        %v724 = vsub.s32 0, %v723
        %v725 = vrot.slane %v721, %v724
        %v742 = vunpack.c.l.b16 %v705
        %v743 = vunpack.c.l.b16 %v706
        %v744 = vunpack.c.l.b16 %v707
        %v745 = vunpack.c.l.b16 %v708
        %v746 = vunpack.c.l.b16 %v709
        %v747 = vunpack.c.l.b16 %v710
        %v748 = vunpack.c.l.b16 %v711
        %v749 = vunpack.c.l.b16 %v712
        %v750 = vunpack.c.l.b16 %v713
        %v751 = vunpack.c.l.b16 %v714
        %v752 = vunpack.c.l.b16 %v715
        %v753 = vunpack.c.l.b16 %v716
        %v754 = vunpack.c.l.b16 %v717
        %v755 = vunpack.c.l.b16 %v718
        %v756 = vunpack.c.l.b16 %v719
        %v757 = vunpack.c.l.b16 %v720
        %v758 = vpack.c.b16 %v743, %v742
        %v759 = vpack.c.b16 %v745, %v744
        %v760 = vpack.c.b16 %v747, %v746
        %v761 = vpack.c.b16 %v749, %v748
        %v762 = vpack.c.b16 %v751, %v750
        %v763 = vpack.c.b16 %v753, %v752
        %v764 = vpack.c.b16 %v755, %v754
        %v765 = vpack.c.b16 %v757, %v756
        %774 = vmatprep.subr.bf16.mxu0 0
        %775 = vmatpush1.bf16.msra.mxu0 %v765
        %776 = vmatprep.subr.bf16.mxu0 0
        %777 = vmatpush1.bf16.msra.mxu0 %v764
        %778 = vmatprep.subr.bf16.mxu0 0
        %779 = vmatpush1.bf16.msra.mxu0 %v763
        %780 = vmatprep.subr.bf16.mxu0 0
        %781 = vmatpush1.bf16.msra.mxu0 %v762
        %782 = vmatprep.subr.bf16.mxu0 0
        %783 = vmatpush1.bf16.msra.mxu0 %v761
        %784 = vmatprep.subr.bf16.mxu0 0
        %785 = vmatpush1.bf16.msra.mxu0 %v760
        %786 = vmatprep.subr.bf16.mxu0 0
        %787 = vmatpush1.bf16.msra.mxu0 %v759
        %788 = vmatprep.subr.bf16.mxu0 0
        %789 = vmatpush1.bf16.msra.mxu0 %v758
        %790 = vmatprep.subr.bf16.mxu0 0
        %791 = vmatpush2.bf16.msra.mxu0 0
        %792 = vmatprep.subr.bf16.mxu0 0
        %793 = vmatpush2.bf16.msra.mxu0 0
        %794 = vmatprep.subr.bf16.mxu0 0
        %795 = vmatpush2.bf16.msra.mxu0 0
        %796 = vmatprep.subr.bf16.mxu0 0
        %797 = vmatpush2.bf16.msra.mxu0 0
        %798 = vmatprep.subr.bf16.mxu0 0
        %799 = vmatpush2.bf16.msra.mxu0 0
        %800 = vmatprep.subr.bf16.mxu0 0
        %801 = vmatpush2.bf16.msra.mxu0 0
        %802 = vmatprep.subr.bf16.mxu0 0
        %803 = vmatpush2.bf16.msra.mxu0 0
        %804 = vmatprep.subr.bf16.mxu0 0
        %805 = vmatpush2.bf16.msra.mxu0 0
        %806 = vmatprep.mubr.bf16.mxu0 0
        %807 = vmatmul.mubr.bf16.gmra.mxu0 %v697
        %v808 = vpop.f32.mrf.mxu0
        %v809 = vadd.f32 %v725, %v808
        %v810 = vpop.f32.mrf.mxu0
        %v811 = vpop.f32.mrf.mxu0
        %v812 = vadd.f32 %v725, %v811
        %v813 = vpop.f32.mrf.mxu0
        %814 = vmatprep.mubr.bf16.mxu0 0
        %815 = vmatmul.mubr.bf16.gmra.mxu0 %v698
        %v816 = vpop.f32.mrf.mxu0
        %v817 = vadd.f32 %v725, %v816
        %v818 = vpop.f32.mrf.mxu0
        %v819 = vpop.f32.mrf.mxu0
        %v820 = vadd.f32 %v725, %v819
        %v821 = vpop.f32.mrf.mxu0
        %822 = vmatprep.mubr.bf16.mxu0 0
        %823 = vmatmul.mubr.bf16.gmra.mxu0 %v699
        %v824 = vpop.f32.mrf.mxu0
        %v825 = vadd.f32 %v725, %v824
        %v826 = vpop.f32.mrf.mxu0
        %v827 = vpop.f32.mrf.mxu0
        %v828 = vadd.f32 %v725, %v827
        %v829 = vpop.f32.mrf.mxu0
        %830 = vmatprep.mubr.bf16.mxu0 0
        %831 = vmatmul.mubr.bf16.gmra.mxu0 %v700
        %v832 = vpop.f32.mrf.mxu0
        %v833 = vadd.f32 %v725, %v832
        %v834 = vpop.f32.mrf.mxu0
        %v835 = vpop.f32.mrf.mxu0
        %v836 = vadd.f32 %v725, %v835
        %v837 = vpop.f32.mrf.mxu0
        %838 = vmatprep.mubr.bf16.mxu0 0
        %839 = vmatmul.mubr.bf16.gmra.mxu0 %v701
        %v840 = vpop.f32.mrf.mxu0
        %v841 = vadd.f32 %v725, %v840
        %v842 = vpop.f32.mrf.mxu0
        %v843 = vpop.f32.mrf.mxu0
        %v844 = vadd.f32 %v725, %v843
        %v845 = vpop.f32.mrf.mxu0
        %846 = vmatprep.mubr.bf16.mxu0 0
        %847 = vmatmul.mubr.bf16.gmra.mxu0 %v702
        %v848 = vpop.f32.mrf.mxu0
        %v849 = vadd.f32 %v725, %v848
        %v850 = vpop.f32.mrf.mxu0
        %v851 = vpop.f32.mrf.mxu0
        %v852 = vadd.f32 %v725, %v851
        %v853 = vpop.f32.mrf.mxu0
        %854 = vmatprep.mubr.bf16.mxu0 0
        %855 = vmatmul.mubr.bf16.gmra.mxu0 %v703
        %v856 = vpop.f32.mrf.mxu0
        %v857 = vadd.f32 %v725, %v856
        %v858 = vpop.f32.mrf.mxu0
        %v859 = vpop.f32.mrf.mxu0
        %v860 = vadd.f32 %v725, %v859
        %v861 = vpop.f32.mrf.mxu0
        %862 = vmatprep.mubr.bf16.mxu0 0
        %863 = vmatmul.mubr.bf16.gmra.mxu0 %v704
        %v864 = vpop.f32.mrf.mxu0
        %v865 = vadd.f32 %v725, %v864
        %v866 = vpop.f32.mrf.mxu0
        %v867 = vpop.f32.mrf.mxu0
        %v868 = vadd.f32 %v725, %v867
        %v869 = vpop.f32.mrf.mxu0
        %870 = vdwg.mxu0
        %v871 = vpack.c.bf16 %v812, %v809
        %v872 = vpack.c.bf16 %v820, %v817
        %v873 = vpack.c.bf16 %v828, %v825
        %v874 = vpack.c.bf16 %v836, %v833
        %v875 = vpack.c.bf16 %v844, %v841
        %v876 = vpack.c.bf16 %v852, %v849
        %v877 = vpack.c.bf16 %v860, %v857
        %v878 = vpack.c.bf16 %v868, %v865
        %v887 = vunpack.c.l.b16 %v871
        %v888 = vunpack.c.h.b16 %v871
        %v889 = vunpack.c.l.b16 %v872
        %v890 = vunpack.c.h.b16 %v872
        %v891 = vunpack.c.l.b16 %v873
        %v892 = vunpack.c.h.b16 %v873
        %v893 = vunpack.c.l.b16 %v874
        %v894 = vunpack.c.h.b16 %v874
        %v895 = vunpack.c.l.b16 %v875
        %v896 = vunpack.c.h.b16 %v875
        %v897 = vunpack.c.l.b16 %v876
        %v898 = vunpack.c.h.b16 %v876
        %v899 = vunpack.c.l.b16 %v877
        %v900 = vunpack.c.h.b16 %v877
        %v901 = vunpack.c.l.b16 %v878
        %v902 = vunpack.c.h.b16 %v878
        %v903 = vpack.c.b16 %v887, %v887
        %v904 = vpack.c.b16 %v888, %v888
        %v905 = vpack.c.b16 %v889, %v889
        %v906 = vpack.c.b16 %v890, %v890
        %v907 = vpack.c.b16 %v891, %v891
        %v908 = vpack.c.b16 %v892, %v892
        %v909 = vpack.c.b16 %v893, %v893
        %v910 = vpack.c.b16 %v894, %v894
        %v911 = vpack.c.b16 %v895, %v895
        %v912 = vpack.c.b16 %v896, %v896
        %v913 = vpack.c.b16 %v897, %v897
        %v914 = vpack.c.b16 %v898, %v898
        %v915 = vpack.c.b16 %v899, %v899
        %v916 = vpack.c.b16 %v900, %v900
        %v917 = vpack.c.b16 %v901, %v901
        %v918 = vpack.c.b16 %v902, %v902
        %935 = vst [vmem:[%s222] sm:$0xf] %v903
        %936 = vst [vmem:[%s222 + $0x4] sm:$0xf] %v904
        %937 = vst [vmem:[%s222 + $0x8] sm:$0xf] %v905
        %938 = vst [vmem:[%s222 + $0xc] sm:$0xf] %v906
        %939 = vst [vmem:[%s222 + $0x10] sm:$0xf] %v907
        %940 = vst [vmem:[%s222 + $0x14] sm:$0xf] %v908
        %941 = vst [vmem:[%s222 + $0x18] sm:$0xf] %v909
        %942 = vst [vmem:[%s222 + $0x1c] sm:$0xf] %v910
        %943 = vst [vmem:[%s222 + $0x20] sm:$0xf] %v911
        %944 = vst [vmem:[%s222 + $0x24] sm:$0xf] %v912
        %945 = vst [vmem:[%s222 + $0x28] sm:$0xf] %v913
        %946 = vst [vmem:[%s222 + $0x2c] sm:$0xf] %v914
        %947 = vst [vmem:[%s222 + $0x30] sm:$0xf] %v915
        %948 = vst [vmem:[%s222 + $0x34] sm:$0xf] %v916
        %949 = vst [vmem:[%s222 + $0x38] sm:$0xf] %v917
        %950 = vst [vmem:[%s222 + $0x3c] sm:$0xf] %v918
        %951 = vst [vmem:[%s229] sm:$0xf] %v903
        %952 = vst [vmem:[%s229 + $0x8] sm:$0xf] %v904
        %953 = vst [vmem:[%s229 + $0x4] sm:$0xf] %v903
        %954 = vst [vmem:[%s229 + $0xc] sm:$0xf] %v904
        %955 = vst [vmem:[%s229 + $0x10] sm:$0xf] %v903
        %956 = vst [vmem:[%s229 + $0x18] sm:$0xf] %v904
        %957 = vst [vmem:[%s229 + $0x14] sm:$0xf] %v903
        %958 = vst [vmem:[%s229 + $0x1c] sm:$0xf] %v904
        %959 = vst [vmem:[%s229 + $0x20] sm:$0xf] %v905
        %960 = vst [vmem:[%s229 + $0x28] sm:$0xf] %v906
        %961 = vst [vmem:[%s229 + $0x24] sm:$0xf] %v905
        %962 = vst [vmem:[%s229 + $0x2c] sm:$0xf] %v906
        %963 = vst [vmem:[%s229 + $0x30] sm:$0xf] %v905
        %964 = vst [vmem:[%s229 + $0x38] sm:$0xf] %v906
        %965 = vst [vmem:[%s229 + $0x34] sm:$0xf] %v905
        %966 = vst [vmem:[%s229 + $0x3c] sm:$0xf] %v906
        %967 = vst [vmem:[%s229 + $0x40] sm:$0xf] %v907
        %968 = vst [vmem:[%s229 + $0x48] sm:$0xf] %v908
        %969 = vst [vmem:[%s229 + $0x44] sm:$0xf] %v907
        %970 = vst [vmem:[%s229 + $0x4c] sm:$0xf] %v908
        %971 = vst [vmem:[%s229 + $0x50] sm:$0xf] %v907
        %972 = vst [vmem:[%s229 + $0x58] sm:$0xf] %v908
        %973 = vst [vmem:[%s229 + $0x54] sm:$0xf] %v907
        %974 = vst [vmem:[%s229 + $0x5c] sm:$0xf] %v908
        %975 = vst [vmem:[%s229 + $0x60] sm:$0xf] %v909
        %976 = vst [vmem:[%s229 + $0x68] sm:$0xf] %v910
        %977 = vst [vmem:[%s229 + $0x64] sm:$0xf] %v909
        %978 = vst [vmem:[%s229 + $0x6c] sm:$0xf] %v910
        %979 = vst [vmem:[%s229 + $0x70] sm:$0xf] %v909
        %980 = vst [vmem:[%s229 + $0x78] sm:$0xf] %v910
        %981 = vst [vmem:[%s229 + $0x74] sm:$0xf] %v909
        %982 = vst [vmem:[%s229 + $0x7c] sm:$0xf] %v910
        %983 = vst [vmem:[%s229 + $0x80] sm:$0xf] %v911
        %984 = vst [vmem:[%s229 + $0x88] sm:$0xf] %v912
        %985 = vst [vmem:[%s229 + $0x84] sm:$0xf] %v911
        %986 = vst [vmem:[%s229 + $0x8c] sm:$0xf] %v912
        %987 = vst [vmem:[%s229 + $0x90] sm:$0xf] %v911
        %988 = vst [vmem:[%s229 + $0x98] sm:$0xf] %v912
        %989 = vst [vmem:[%s229 + $0x94] sm:$0xf] %v911
        %990 = vst [vmem:[%s229 + $0x9c] sm:$0xf] %v912
        %991 = vst [vmem:[%s229 + $0xa0] sm:$0xf] %v913
        %992 = vst [vmem:[%s229 + $0xa8] sm:$0xf] %v914
        %993 = vst [vmem:[%s229 + $0xa4] sm:$0xf] %v913
        %994 = vst [vmem:[%s229 + $0xac] sm:$0xf] %v914
        %995 = vst [vmem:[%s229 + $0xb0] sm:$0xf] %v913
        %996 = vst [vmem:[%s229 + $0xb8] sm:$0xf] %v914
        %997 = vst [vmem:[%s229 + $0xb4] sm:$0xf] %v913
        %998 = vst [vmem:[%s229 + $0xbc] sm:$0xf] %v914
        %999 = vst [vmem:[%s229 + $0xc0] sm:$0xf] %v915
        %1000 = vst [vmem:[%s229 + $0xc8] sm:$0xf] %v916
        %1001 = vst [vmem:[%s229 + $0xc4] sm:$0xf] %v915
        %1002 = vst [vmem:[%s229 + $0xcc] sm:$0xf] %v916
        %1003 = vst [vmem:[%s229 + $0xd0] sm:$0xf] %v915
        %1004 = vst [vmem:[%s229 + $0xd8] sm:$0xf] %v916
        %1005 = vst [vmem:[%s229 + $0xd4] sm:$0xf] %v915
        %1006 = vst [vmem:[%s229 + $0xdc] sm:$0xf] %v916
        %1007 = vst [vmem:[%s229 + $0xe0] sm:$0xf] %v917
        %1008 = vst [vmem:[%s229 + $0xe8] sm:$0xf] %v918
        %1009 = vst [vmem:[%s229 + $0xe4] sm:$0xf] %v917
        %1010 = vst [vmem:[%s229 + $0xec] sm:$0xf] %v918
        %1011 = vst [vmem:[%s229 + $0xf0] sm:$0xf] %v917
        %1012 = vst [vmem:[%s229 + $0xf8] sm:$0xf] %v918
        %1013 = vst [vmem:[%s229 + $0xf4] sm:$0xf] %v917
        %1014 = vst [vmem:[%s229 + $0xfc] sm:$0xf] %v918
        %s1015 = sand.u32 %s120, 1
        %s1016 = scalar_lea.sflag [#allocation3], %s1015
        %s1017 = sand.u32 %s120, 1
        %s1018 = smul.addr %s1017, 64
        %s1019 = scalar_lea.vmem [#allocation2], %s1018
        %s1020 = sand.u32 %s146, 1
        %s1021 = scalar_lea.sflag [#allocation5], %s1020
        %s1022 = sand.u32 %s146, 1
        %s1023 = smul.addr %s1022, 256
        %s1024 = scalar_lea.vmem [#allocation4], %s1023
        // Predicated region
        $region37: #{tpu_custom_call.1} parent=35 // pred_check
          %p1025 = pneg %p130
        $region38: #{tpu_custom_call.1} parent=35 // pred_check_branch
          %1027 = sbr.rel (%p1025) target = $region40
        $region39: #{tpu_custom_call.1} parent=35 // pred_region
          %s1028 = smul.u32 16, %s23
          %s1030 = ssub.s32 1024, 1024
          %1031 = vsyncadd %s1016, %s1030
          %s1032 = smul.addr %s1028, 64
          %s1033 = scalar_lea.hbm %s4, %s1032
          %s1034 = sshll.u32 %s1019, 4
          %s1035 = int_to_ptr.vmem [resolvable:$true] %s1034
          %1040 = dma.vmem_to_hbm [thread:$0]  %s1035, 1024, %s1033, %s1016, 64, 64, 4
        $region40: #{tpu_custom_call.1} parent=35 // pred_fallthru
          _
        // Predicated region
        $region41: #{tpu_custom_call.1} parent=35 // pred_check
          %p1041 = pneg %p156
        $region42: #{tpu_custom_call.1} parent=35 // pred_check_branch
          %1043 = sbr.rel (%p1041) target = $region44
        $region43: #{tpu_custom_call.1} parent=35 // pred_region
          %s1044 = smul.u32 32, %s23
          %s1046 = ssub.s32 4096, 4096
          %1047 = vsyncadd %s1021, %s1046
          %s1048 = smul.addr %s1044, 2
          %s1049 = smul.addr %s1048, 64
          %s1050 = scalar_lea.hbm %s5, %s1049
          %s1051 = sshll.u32 %s1024, 4
          %s1052 = int_to_ptr.vmem [resolvable:$true] %s1051
          %1057 = dma.vmem_to_hbm [thread:$0]  %s1052, 4096, %s1050, %s1021, 128, 128, 8
        $region44: #{tpu_custom_call.1} parent=35 // pred_fallthru
          _
      $region36: #{tpu_custom_call.1} parent=5 // pred_fallthru
        _
      %p1058 = scmp.le.s32.totalorder 2, %s18
      // Predicated region
      $region45: #{tpu_custom_call.1} parent=5 // pred_check
        %p1059 = pneg %p1058
      $region46: #{tpu_custom_call.1} parent=5 // pred_check_branch
        %1061 = sbr.rel (%p1059) target = $region48
      $region47: #{tpu_custom_call.1} parent=5 // pred_region
        %s1062 = ssub.s32 %s18, 2
        // Predicated region
        $region49: #{tpu_custom_call.1} parent=47 // pred_check
          %p1063 = pneg %p136
        $region50: #{tpu_custom_call.1} parent=47 // pred_check_branch
          %1065 = sbr.rel (%p1063) target = $region52
        $region51: #{tpu_custom_call.1} parent=47 // pred_region
          %s1066 = sand.u32 %s121, 1
          %s1067 = scalar_lea.sflag [#allocation3], %s1066
          %s1068 = sand.u32 %s121, 1
          %s1069 = smul.addr %s1068, 64
          %s1070 = scalar_lea.vmem [#allocation2], %s1069
          %1071 = dma.done %s1067, 1024
        $region52: #{tpu_custom_call.1} parent=47 // pred_fallthru
          _
        // Predicated region
        $region53: #{tpu_custom_call.1} parent=47 // pred_check
          %p1072 = pneg %p162
        $region54: #{tpu_custom_call.1} parent=47 // pred_check_branch
          %1074 = sbr.rel (%p1072) target = $region56
        $region55: #{tpu_custom_call.1} parent=47 // pred_region
          %s1075 = sand.u32 %s147, 1
          %s1076 = scalar_lea.sflag [#allocation5], %s1075
          %s1077 = sand.u32 %s147, 1
          %s1078 = smul.addr %s1077, 256
          %s1079 = scalar_lea.vmem [#allocation4], %s1078
          %1080 = dma.done %s1076, 4096
        $region56: #{tpu_custom_call.1} parent=47 // pred_fallthru
          _
      $region48: #{tpu_custom_call.1} parent=5 // pred_fallthru
        _
    $region6: #{tpu_custom_call.1} parent=1 // loop_footer
      %s22 = sadd.s32 1, %s18
    $region7: #{tpu_custom_call.1} parent=1 // loop_footer_branch
      %17 = sbr.rel target = $region3
    $region8: #{tpu_custom_call.1} parent=1 // loop_exit
      _
    %1081 = vsyncpa [#allocation3], 1
    %s1082 = scalar_lea.sflag [#allocation3], 1
    %1083 = vsyncpa %s1082, 1
    %1084 = vsyncpa [#allocation5], 1
    %s1085 = scalar_lea.sflag [#allocation5], 1
    %1086 = vsyncpa %s1085, 1

</llo_original>
